<compile_context>
chip_gen: v5e
topology: v5e:2x2
jax: 0.10.0
libtpu: 0.0.40
codegen_flags: <defaults>
</compile_context>

<pallas_src>
import functools

import jax
import jax.numpy as jnp
from jax.experimental import pallas as pl
from jax.experimental.pallas import tpu as pltpu

D_MODEL = 256
D_FF = 256
LN_EPS = 1e-5


# ---------------- Pallas kernel ----------------

def _ffn_ln_kernel(x_ref, w1_ref, w2_ref, o_ref, *, eps):
    # x_ref: (tm, d_model) bf16, w1_ref: (d_model, d_ff) bf16, w2_ref: (d_ff, d_model) bf16
    x_bf = x_ref[...]
    x_f32 = x_bf.astype(jnp.float32)          # residual / LayerNorm math stays f32

    # FFN: single-pass bf16 MXU matmuls, f32 accumulation.
    h = jnp.dot(x_bf, w1_ref[...], preferred_element_type=jnp.float32)
    h = jnp.maximum(h, 0.0)                                    # ReLU (f32, VPU)
    y = jnp.dot(h.astype(jnp.bfloat16), w2_ref[...],
                preferred_element_type=jnp.float32)
    y = y + x_f32                                              # residual (f32)

    # LayerNorm over d_model (fresh nn.LayerNorm: gamma=1, beta=0), f32 throughout.
    mean = jnp.mean(y, axis=-1, keepdims=True)
    c = y - mean
    var = jnp.mean(c * c, axis=-1, keepdims=True)
    o_ref[...] = (c * jax.lax.rsqrt(var + eps)).astype(o_ref.dtype)


# ---------------- wrapper ----------------

def poswise_feed_forward(x, w1, w2, *, eps=LN_EPS, row_tile=1024, out_dtype=None):
    """x: (..., d_model); w1: (d_model, d_ff); w2: (d_ff, d_model).

    Computes LayerNorm(relu(x @ w1) @ w2 + x) with unit gamma / zero beta,
    matching PoswiseFeedForwardNet.forward (weights are the PyTorch Linear
    weights pre-transposed to (in, out)).  Matmuls run as bf16 x bf16 -> f32;
    residual + LayerNorm are computed in f32."""
    orig_shape = x.shape
    D = orig_shape[-1]
    F = w1.shape[-1]
    out_dtype = jnp.dtype(out_dtype or x.dtype)

    # Flatten to (M, D): rows on sublanes, D=256 dense on lanes.
    x2 = x.reshape(-1, D).astype(jnp.bfloat16)
    w1b = w1.astype(jnp.bfloat16)
    w2b = w2.astype(jnp.bfloat16)
    M = x2.shape[0]

    # Large fixed row tile + cdiv grid (partial last block is masked by Pallas).
    # If M fits in one tile, the block equals the full array (exempt from the
    # (8,128) divisibility rule), otherwise the 1024-row tile satisfies it.
    tm = min(row_tile, M)
    grid = (pl.cdiv(M, tm),)

    # Advisory cost hint for XLA's scheduler.
    bytes_accessed = (M * D * 2                      # bf16 activations in
                      + M * D * out_dtype.itemsize   # output
                      + (D * F + F * D) * 2)         # bf16 weights
    cost = pl.CostEstimate(flops=4 * M * D * F,      # two matmuls @ 2*M*D*F each
                           transcendentals=M,        # one rsqrt per row
                           bytes_accessed=bytes_accessed)

    kernel = functools.partial(_ffn_ln_kernel, eps=eps)
    out = pl.pallas_call(
        kernel,
        out_shape=jax.ShapeDtypeStruct((M, D), out_dtype),
        grid_spec=pltpu.PrefetchScalarGridSpec(
            num_scalar_prefetch=0,
            grid=grid,
            in_specs=[
                pl.BlockSpec((tm, D), lambda i: (i, 0)),   # activations, tiled over rows
                pl.BlockSpec((D, F), lambda i: (0, 0)),    # W1, VMEM-resident
                pl.BlockSpec((F, D), lambda i: (0, 0)),    # W2, VMEM-resident
            ],
            out_specs=pl.BlockSpec((tm, D), lambda i: (i, 0)),
        ),
        compiler_params=pltpu.CompilerParams(
            dimension_semantics=("parallel",)),   # independent row tiles -> megacore OK
        cost_estimate=cost,
    )(x2, w1b, w2b)
    return out.reshape(orig_shape)


# ---------------- demo / self-check ----------------

if __name__ == "__main__":
    key = jax.random.PRNGKey(0)
    kx, k1, k2 = jax.random.split(key, 3)

    B, S = 2, 8                                  # small batch / seq; d_model fixed by module
    x = jax.random.normal(kx, (B, S, D_MODEL), dtype=jnp.float32)

    # PyTorch Linear(d_in, d_out, bias=False): y = x @ W.T with W ~ U(-1/sqrt(d_in), ...).
    # Store weights pre-transposed to (in, out) so the kernel does x @ W directly.
    lim1 = 1.0 / (D_MODEL ** 0.5)
    lim2 = 1.0 / (D_FF ** 0.5)
    w1 = jax.random.uniform(k1, (D_MODEL, D_FF), jnp.float32, -lim1, lim1)
    w2 = jax.random.uniform(k2, (D_FF, D_MODEL), jnp.float32, -lim2, lim2)

    out = jax.block_until_ready(poswise_feed_forward(x, w1, w2))

    # pure-JAX f32 reference (matches the PyTorch module)
    h = jnp.maximum(jnp.dot(x, w1), 0.0)
    y = jnp.dot(h, w2) + x
    mean = y.mean(-1, keepdims=True)
    var = ((y - mean) ** 2).mean(-1, keepdims=True)
    ref = (y - mean) / jnp.sqrt(var + LN_EPS)

    assert out.shape == x.shape
    assert out.dtype == x.dtype
    max_err = float(jnp.max(jnp.abs(out.astype(jnp.float32) - ref)))
    # bf16 matmul operands + bf16 activation streaming -> relaxed tolerance.
    assert jnp.allclose(out.astype(jnp.float32), ref, atol=5e-2, rtol=5e-2), (
        f"mismatch vs reference, max_err={max_err}")

    print("KERNEL_OK")
</pallas_src>

<mosaic_0001>
module attributes {stable_mosaic.version = 11 : i64} {
  func.func @_ffn_ln_kernel(%arg0: i32, %arg1: memref<16x256xbf16, #tpu.memory_space<vmem>>, %arg2: memref<256x256xbf16, #tpu.memory_space<vmem>>, %arg3: memref<256x256xbf16, #tpu.memory_space<vmem>>, %arg4: memref<16x256xf32, #tpu.memory_space<vmem>>) attributes {dimension_semantics = [#tpu.dimension_semantics<parallel>], iteration_bounds = array<i64: 1>, scalar_prefetch = 0 : i64, scratch_operands = 0 : i64, tpu.core_type = #tpu.core_type<tc>, window_params = [{transform_indices = @transform_0, window_bounds = array<i64: 16, 256>}, {pipeline_mode = #tpu.pipeline_mode<synchronous>, transform_indices = @transform_1, window_bounds = array<i64: 256, 256>}, {pipeline_mode = #tpu.pipeline_mode<synchronous>, transform_indices = @transform_2, window_bounds = array<i64: 256, 256>}, {transform_indices = @transform_3, window_bounds = array<i64: 16, 256>}]} {
    %c0 = arith.constant 0 : index
    %c0_0 = arith.constant 0 : index
    %0 = vector.load %arg1[%c0, %c0_0] : memref<16x256xbf16, #tpu.memory_space<vmem>>, vector<16x256xbf16>
    %1 = arith.extf %0 : vector<16x256xbf16> to vector<16x256xf32>
    %c0_1 = arith.constant 0 : index
    %c0_2 = arith.constant 0 : index
    %2 = vector.load %arg2[%c0_1, %c0_2] : memref<256x256xbf16, #tpu.memory_space<vmem>>, vector<256x256xbf16>
    %cst = arith.constant dense<0.000000e+00> : vector<16x256xf32>
    %3 = tpu.matmul %0, %2, %cst {dimension_numbers = #tpu.dot_dimension_numbers<[1], [0], [0], [1], [0, 0, 1, 1], [], []>} : vector<16x256xbf16>, vector<256x256xbf16>, vector<16x256xf32> -> vector<16x256xf32>
    %cst_3 = arith.constant 0.000000e+00 : f32
    %4 = vector.broadcast %cst_3 : f32 to vector<16x256xf32>
    %5 = arith.maximumf %3, %4 : vector<16x256xf32>
    %6 = arith.truncf %5 : vector<16x256xf32> to vector<16x256xbf16>
    %c0_4 = arith.constant 0 : index
    %c0_5 = arith.constant 0 : index
    %7 = vector.load %arg3[%c0_4, %c0_5] : memref<256x256xbf16, #tpu.memory_space<vmem>>, vector<256x256xbf16>
    %cst_6 = arith.constant dense<0.000000e+00> : vector<16x256xf32>
    %8 = tpu.matmul %6, %7, %cst_6 {dimension_numbers = #tpu.dot_dimension_numbers<[1], [0], [0], [1], [0, 0, 1, 1], [], []>} : vector<16x256xbf16>, vector<256x256xbf16>, vector<16x256xf32> -> vector<16x256xf32>
    %9 = arith.addf %8, %1 : vector<16x256xf32>
    %cst_7 = arith.constant dense<0.000000e+00> : vector<16xf32>
    %10 = vector.multi_reduction <add>, %9, %cst_7 [1] : vector<16x256xf32> to vector<16xf32>
    %11 = vector.shape_cast %10 : vector<16xf32> to vector<16x1xf32>
    %cst_8 = arith.constant 2.560000e+02 : f32
    %12 = vector.broadcast %cst_8 : f32 to vector<16x1xf32>
    %13 = arith.divf %11, %12 : vector<16x1xf32>
    %14 = vector.broadcast %13 : vector<16x1xf32> to vector<16x256xf32>
    %15 = arith.subf %9, %14 : vector<16x256xf32>
    %16 = arith.mulf %15, %15 : vector<16x256xf32>
    %cst_9 = arith.constant dense<0.000000e+00> : vector<16xf32>
    %17 = vector.multi_reduction <add>, %16, %cst_9 [1] : vector<16x256xf32> to vector<16xf32>
    %18 = vector.shape_cast %17 : vector<16xf32> to vector<16x1xf32>
    %cst_10 = arith.constant 2.560000e+02 : f32
    %19 = vector.broadcast %cst_10 : f32 to vector<16x1xf32>
    %20 = arith.divf %18, %19 : vector<16x1xf32>
    %cst_11 = arith.constant 9.99999974E-6 : f32
    %21 = vector.broadcast %cst_11 : f32 to vector<16x1xf32>
    %22 = arith.addf %20, %21 : vector<16x1xf32>
    %23 = math.rsqrt %22 : vector<16x1xf32>
    %24 = vector.broadcast %23 : vector<16x1xf32> to vector<16x256xf32>
    %25 = arith.mulf %15, %24 : vector<16x256xf32>
    %c0_12 = arith.constant 0 : index
    %c0_13 = arith.constant 0 : index
    %26 = vector.load %arg4[%c0_12, %c0_13] : memref<16x256xf32, #tpu.memory_space<vmem>>, vector<16x256xf32>
    tpu.vector_store %arg4[%c0_12, %c0_13], %25 {strides = array<i32>} : memref<16x256xf32, #tpu.memory_space<vmem>>, vector<16x256xf32>,
    return
  }
  func.func @transform_0(%arg0: i32) -> (i32, i32) {
    %c0_i32 = arith.constant 0 : i32
    %c0_i32_0 = arith.constant 0 : i32
    return %arg0, %c0_i32 : i32, i32
  }
  func.func @transform_1(%arg0: i32) -> (i32, i32) {
    %c0_i32 = arith.constant 0 : i32
    %c0_i32_0 = arith.constant 0 : i32
    %c0_i32_1 = arith.constant 0 : i32
    return %c0_i32, %c0_i32_0 : i32, i32
  }
  func.func @transform_2(%arg0: i32) -> (i32, i32) {
    %c0_i32 = arith.constant 0 : i32
    %c0_i32_0 = arith.constant 0 : i32
    %c0_i32_1 = arith.constant 0 : i32
    return %c0_i32, %c0_i32_0 : i32, i32
  }
  func.func @transform_3(%arg0: i32) -> (i32, i32) {
    %c0_i32 = arith.constant 0 : i32
    %c0_i32_0 = arith.constant 0 : i32
    return %arg0, %c0_i32 : i32, i32
  }
}

</mosaic_0001>

<llo_original>
// kernel: tpu_custom_call.1
$region0: #{tpu_custom_call.1}
  #allocation0 [shape = 'u32[]', space=smem, size = 0x4, offset = 0x4, fixed_abs, tag = 'smem constant byte address 0x4 - core index']
  #allocation1 [shape = 'u32[72,128]{1,0:T(1,128)}', space=vmem, size = 0x9000, scoped, tag = 'internal scratch']
  %s0 = inlined_call_operand.hbm [shape: bf16[16,256], index: 0, kind: input, shape index: {}]
  %s1 = inlined_call_operand.hbm [shape: bf16[256,256], index: 1, kind: input, shape index: {}]
  %s2 = inlined_call_operand.hbm [shape: bf16[256,256], index: 2, kind: input, shape index: {}]
  %s3 = inlined_call_operand.hbm [shape: f32[16,256], index: 3, kind: output, shape index: {}]
  %s4 = sld [smem:[#allocation0]]
  $region34: #{tpu_custom_call.1} parent=0
    _
  %s6 = ssub.s32 1, %s4
  %s7 = scalar_select 0, %s6, %s4
  $region1: #{tpu_custom_call.1} parent=0
    #allocation2 [shape = 'u8[8192]{0}', space=vmem, size = 0x2000, scoped, tag = 'input window, operand 0, single buffered']
    #allocation3 [shape = 's32[1]{0}', space=sflag, size = 0x4, scoped, tag = 'scoped memory for tpu_custom_call.1']
    #allocation4 [shape = 's32[1]{0}', space=sflag, size = 0x4, scoped, tag = 'scoped memory for tpu_custom_call.1']
    #allocation5 [shape = 'u8[131072]{0}', space=vmem, size = 0x20000, scoped, tag = 'input window, operand 1, single buffered']
    #allocation6 [shape = 's32[1]{0}', space=sflag, size = 0x4, scoped, tag = 'scoped memory for tpu_custom_call.1']
    #allocation7 [shape = 'u8[131072]{0}', space=vmem, size = 0x20000, scoped, tag = 'input window, operand 2, single buffered']
    #allocation8 [shape = 'u8[16384]{0}', space=vmem, size = 0x4000, scoped, tag = 'output window, operand 0, single buffered']
    %8 = vsyncpa [#allocation3], 0
    %9 = vsyncpa [#allocation6], 0
    %10 = vsyncpa [#allocation4], 0
    // Predicated region
    $region2: #{tpu_custom_call.1} parent=1 // pred_check
      _
    $region3: #{tpu_custom_call.1} parent=1 // pred_check_branch
      %12 = sbr.rel (0) target = $region5
    $region4: #{tpu_custom_call.1} parent=1 // pred_region
      %14 = vsyncadd [#allocation3], 0
      %s15 = sshll.u32 %s0, 4
      %s16 = int_to_ptr.hbm [resolvable:$true] %s15
      %s17 = sshll.u32 [#allocation2], 4
      %s18 = int_to_ptr.vmem [resolvable:$true] %s17
      %23 = dma.hbm_to_vmem [thread:$0]  %s16, 256, %s18, [#allocation3], 128, 128, 8
    $region5: #{tpu_custom_call.1} parent=1 // pred_fallthru
      _
    // Predicated region
    $region6: #{tpu_custom_call.1} parent=1 // pred_check
      _
    $region7: #{tpu_custom_call.1} parent=1 // pred_check_branch
      %25 = sbr.rel (0) target = $region9
    $region8: #{tpu_custom_call.1} parent=1 // pred_region
      %27 = vsyncadd [#allocation6], 0
      %s28 = sshll.u32 %s1, 4
      %s29 = int_to_ptr.hbm [resolvable:$true] %s28
      %s30 = sshll.u32 [#allocation5], 4
      %s31 = int_to_ptr.vmem [resolvable:$true] %s30
      %36 = dma.hbm_to_vmem [thread:$0]  %s29, 4096, %s31, [#allocation6], 128, 128, 8
    $region9: #{tpu_custom_call.1} parent=1 // pred_fallthru
      _
    // Predicated region
    $region10: #{tpu_custom_call.1} parent=1 // pred_check
      _
    $region11: #{tpu_custom_call.1} parent=1 // pred_check_branch
      %38 = sbr.rel (0) target = $region13
    $region12: #{tpu_custom_call.1} parent=1 // pred_region
      %40 = vsyncadd [#allocation6], 0
      %s41 = sshll.u32 %s2, 4
      %s42 = int_to_ptr.hbm [resolvable:$true] %s41
      %s43 = sshll.u32 [#allocation7], 4
      %s44 = int_to_ptr.vmem [resolvable:$true] %s43
      %49 = dma.hbm_to_vmem [thread:$0]  %s42, 4096, %s44, [#allocation6], 128, 128, 8
    $region13: #{tpu_custom_call.1} parent=1 // pred_fallthru
      _
    // Predicated region
    $region14: #{tpu_custom_call.1} parent=1 // pred_check
      _
    $region15: #{tpu_custom_call.1} parent=1 // pred_check_branch
      %51 = sbr.rel (0) target = $region17
    $region16: #{tpu_custom_call.1} parent=1 // pred_region
      %53 = dma.done [#allocation3], 256
    $region17: #{tpu_custom_call.1} parent=1 // pred_fallthru
      _
    // Predicated region
    $region18: #{tpu_custom_call.1} parent=1 // pred_check
      _
    $region19: #{tpu_custom_call.1} parent=1 // pred_check_branch
      %55 = sbr.rel (0) target = $region21
    $region20: #{tpu_custom_call.1} parent=1 // pred_region
      %57 = dma.done [#allocation6], 4096
    $region21: #{tpu_custom_call.1} parent=1 // pred_fallthru
      _
    // Predicated region
    $region22: #{tpu_custom_call.1} parent=1 // pred_check
      _
    $region23: #{tpu_custom_call.1} parent=1 // pred_check_branch
      %59 = sbr.rel (0) target = $region25
    $region24: #{tpu_custom_call.1} parent=1 // pred_region
      %61 = dma.done [#allocation6], 4096
    $region25: #{tpu_custom_call.1} parent=1 // pred_fallthru
      _
    %v62 = vld [vmem:[#allocation2] sm:$0xff]
    %v63 = vld [vmem:[#allocation2 + $0x8] sm:$0xff]
    %v64 = vunpack.c.l.bf16 %v62
    %v65 = vunpack.c.h.bf16 %v62
    %v66 = vunpack.c.l.bf16 %v63
    %v67 = vunpack.c.h.bf16 %v63
    %v68 = vld [vmem:[#allocation5] sm:$0xff]
    %v69 = vld [vmem:[#allocation5 + $0x8] sm:$0xff]
    %v70 = vld [vmem:[#allocation5 + $0x10] sm:$0xff]
    %v71 = vld [vmem:[#allocation5 + $0x18] sm:$0xff]
    %v72 = vld [vmem:[#allocation5 + $0x20] sm:$0xff]
    %v73 = vld [vmem:[#allocation5 + $0x28] sm:$0xff]
    %v74 = vld [vmem:[#allocation5 + $0x30] sm:$0xff]
    %v75 = vld [vmem:[#allocation5 + $0x38] sm:$0xff]
    %v76 = vld [vmem:[#allocation5 + $0x40] sm:$0xff]
    %v77 = vld [vmem:[#allocation5 + $0x48] sm:$0xff]
    %v78 = vld [vmem:[#allocation5 + $0x50] sm:$0xff]
    %v79 = vld [vmem:[#allocation5 + $0x58] sm:$0xff]
    %v80 = vld [vmem:[#allocation5 + $0x60] sm:$0xff]
    %v81 = vld [vmem:[#allocation5 + $0x68] sm:$0xff]
    %v82 = vld [vmem:[#allocation5 + $0x70] sm:$0xff]
    %v83 = vld [vmem:[#allocation5 + $0x78] sm:$0xff]
    %v84 = vld [vmem:[#allocation5 + $0x80] sm:$0xff]
    %v85 = vld [vmem:[#allocation5 + $0x88] sm:$0xff]
    %v86 = vld [vmem:[#allocation5 + $0x90] sm:$0xff]
    %v87 = vld [vmem:[#allocation5 + $0x98] sm:$0xff]
    %v88 = vld [vmem:[#allocation5 + $0xa0] sm:$0xff]
    %v89 = vld [vmem:[#allocation5 + $0xa8] sm:$0xff]
    %v90 = vld [vmem:[#allocation5 + $0xb0] sm:$0xff]
    %v91 = vld [vmem:[#allocation5 + $0xb8] sm:$0xff]
    %v92 = vld [vmem:[#allocation5 + $0xc0] sm:$0xff]
    %v93 = vld [vmem:[#allocation5 + $0xc8] sm:$0xff]
    %v94 = vld [vmem:[#allocation5 + $0xd0] sm:$0xff]
    %v95 = vld [vmem:[#allocation5 + $0xd8] sm:$0xff]
    %v96 = vld [vmem:[#allocation5 + $0xe0] sm:$0xff]
    %v97 = vld [vmem:[#allocation5 + $0xe8] sm:$0xff]
    %v98 = vld [vmem:[#allocation5 + $0xf0] sm:$0xff]
    %v99 = vld [vmem:[#allocation5 + $0xf8] sm:$0xff]
    %v102 = vunpack.c.l.b16 %v62
    %v103 = vunpack.c.h.b16 %v62
    %v104 = vunpack.c.l.b16 %v63
    %v105 = vunpack.c.h.b16 %v63
    %v106 = vpack.c.b16 %v104, %v102
    %v107 = vpack.c.b16 %v105, %v103
    %v142 = vunpack.c.l.b16 %v68
    %v143 = vunpack.c.h.b16 %v68
    %v144 = vunpack.c.l.b16 %v69
    %v145 = vunpack.c.h.b16 %v69
    %v146 = vunpack.c.l.b16 %v70
    %v147 = vunpack.c.h.b16 %v70
    %v148 = vunpack.c.l.b16 %v71
    %v149 = vunpack.c.h.b16 %v71
    %v150 = vunpack.c.l.b16 %v72
    %v151 = vunpack.c.h.b16 %v72
    %v152 = vunpack.c.l.b16 %v73
    %v153 = vunpack.c.h.b16 %v73
    %v154 = vunpack.c.l.b16 %v74
    %v155 = vunpack.c.h.b16 %v74
    %v156 = vunpack.c.l.b16 %v75
    %v157 = vunpack.c.h.b16 %v75
    %v158 = vunpack.c.l.b16 %v76
    %v159 = vunpack.c.h.b16 %v76
    %v160 = vunpack.c.l.b16 %v77
    %v161 = vunpack.c.h.b16 %v77
    %v162 = vunpack.c.l.b16 %v78
    %v163 = vunpack.c.h.b16 %v78
    %v164 = vunpack.c.l.b16 %v79
    %v165 = vunpack.c.h.b16 %v79
    %v166 = vunpack.c.l.b16 %v80
    %v167 = vunpack.c.h.b16 %v80
    %v168 = vunpack.c.l.b16 %v81
    %v169 = vunpack.c.h.b16 %v81
    %v170 = vunpack.c.l.b16 %v82
    %v171 = vunpack.c.h.b16 %v82
    %v172 = vunpack.c.l.b16 %v83
    %v173 = vunpack.c.h.b16 %v83
    %v174 = vunpack.c.l.b16 %v84
    %v175 = vunpack.c.h.b16 %v84
    %v176 = vunpack.c.l.b16 %v85
    %v177 = vunpack.c.h.b16 %v85
    %v178 = vunpack.c.l.b16 %v86
    %v179 = vunpack.c.h.b16 %v86
    %v180 = vunpack.c.l.b16 %v87
    %v181 = vunpack.c.h.b16 %v87
    %v182 = vunpack.c.l.b16 %v88
    %v183 = vunpack.c.h.b16 %v88
    %v184 = vunpack.c.l.b16 %v89
    %v185 = vunpack.c.h.b16 %v89
    %v186 = vunpack.c.l.b16 %v90
    %v187 = vunpack.c.h.b16 %v90
    %v188 = vunpack.c.l.b16 %v91
    %v189 = vunpack.c.h.b16 %v91
    %v190 = vunpack.c.l.b16 %v92
    %v191 = vunpack.c.h.b16 %v92
    %v192 = vunpack.c.l.b16 %v93
    %v193 = vunpack.c.h.b16 %v93
    %v194 = vunpack.c.l.b16 %v94
    %v195 = vunpack.c.h.b16 %v94
    %v196 = vunpack.c.l.b16 %v95
    %v197 = vunpack.c.h.b16 %v95
    %v198 = vunpack.c.l.b16 %v96
    %v199 = vunpack.c.h.b16 %v96
    %v200 = vunpack.c.l.b16 %v97
    %v201 = vunpack.c.h.b16 %v97
    %v202 = vunpack.c.l.b16 %v98
    %v203 = vunpack.c.h.b16 %v98
    %v204 = vunpack.c.l.b16 %v99
    %v205 = vunpack.c.h.b16 %v99
    %v206 = vpack.c.b16 %v144, %v142
    %v207 = vpack.c.b16 %v145, %v143
    %v208 = vpack.c.b16 %v148, %v146
    %v209 = vpack.c.b16 %v149, %v147
    %v210 = vpack.c.b16 %v152, %v150
    %v211 = vpack.c.b16 %v153, %v151
    %v212 = vpack.c.b16 %v156, %v154
    %v213 = vpack.c.b16 %v157, %v155
    %v214 = vpack.c.b16 %v160, %v158
    %v215 = vpack.c.b16 %v161, %v159
    %v216 = vpack.c.b16 %v164, %v162
    %v217 = vpack.c.b16 %v165, %v163
    %v218 = vpack.c.b16 %v168, %v166
    %v219 = vpack.c.b16 %v169, %v167
    %v220 = vpack.c.b16 %v172, %v170
    %v221 = vpack.c.b16 %v173, %v171
    %v222 = vpack.c.b16 %v176, %v174
    %v223 = vpack.c.b16 %v177, %v175
    %v224 = vpack.c.b16 %v180, %v178
    %v225 = vpack.c.b16 %v181, %v179
    %v226 = vpack.c.b16 %v184, %v182
    %v227 = vpack.c.b16 %v185, %v183
    %v228 = vpack.c.b16 %v188, %v186
    %v229 = vpack.c.b16 %v189, %v187
    %v230 = vpack.c.b16 %v192, %v190
    %v231 = vpack.c.b16 %v193, %v191
    %v232 = vpack.c.b16 %v196, %v194
    %v233 = vpack.c.b16 %v197, %v195
    %v234 = vpack.c.b16 %v200, %v198
    %v235 = vpack.c.b16 %v201, %v199
    %v236 = vpack.c.b16 %v204, %v202
    %v237 = vpack.c.b16 %v205, %v203
    %270 = vmatpush.bf16.msra.mxu0 %v220
    %271 = vmatpush.bf16.msra.mxu0 %v218
    %272 = vmatpush.bf16.msra.mxu0 %v216
    %273 = vmatpush.bf16.msra.mxu0 %v214
    %274 = vmatpush.bf16.msra.mxu0 %v212
    %275 = vmatpush.bf16.msra.mxu0 %v210
    %276 = vmatpush.bf16.msra.mxu0 %v208
    %277 = vmatpush.bf16.msra.mxu0 %v206
    %278 = vmatmul.bf16.gmra.mxu0 %v106
    %v279 = vpop.f32.mrf.mxu0
    %v280 = vadd.f32 0.0, %v279
    %v281 = vpop.f32.mrf.mxu0
    %v282 = vadd.f32 0.0, %v281
    %283 = vdwg.mxu0
    %284 = vmatpush.bf16.msra.mxu0 %v236
    %285 = vmatpush.bf16.msra.mxu0 %v234
    %286 = vmatpush.bf16.msra.mxu0 %v232
    %287 = vmatpush.bf16.msra.mxu0 %v230
    %288 = vmatpush.bf16.msra.mxu0 %v228
    %289 = vmatpush.bf16.msra.mxu0 %v226
    %290 = vmatpush.bf16.msra.mxu0 %v224
    %291 = vmatpush.bf16.msra.mxu0 %v222
    %292 = vmatmul.bf16.gmra.mxu0 %v107
    %v293 = vpop.f32.mrf.mxu0
    %v294 = vadd.f32 %v280, %v293
    %v295 = vpop.f32.mrf.mxu0
    %v296 = vadd.f32 %v282, %v295
    %297 = vdwg.mxu0
    %298 = vmatpush.bf16.msra.mxu0 %v221
    %299 = vmatpush.bf16.msra.mxu0 %v219
    %300 = vmatpush.bf16.msra.mxu0 %v217
    %301 = vmatpush.bf16.msra.mxu0 %v215
    %302 = vmatpush.bf16.msra.mxu0 %v213
    %303 = vmatpush.bf16.msra.mxu0 %v211
    %304 = vmatpush.bf16.msra.mxu0 %v209
    %305 = vmatpush.bf16.msra.mxu0 %v207
    %306 = vmatmul.bf16.gmra.mxu0 %v106
    %v307 = vpop.f32.mrf.mxu0
    %v308 = vadd.f32 0.0, %v307
    %v309 = vpop.f32.mrf.mxu0
    %v310 = vadd.f32 0.0, %v309
    %311 = vdwg.mxu0
    %312 = vmatpush.bf16.msra.mxu0 %v237
    %313 = vmatpush.bf16.msra.mxu0 %v235
    %314 = vmatpush.bf16.msra.mxu0 %v233
    %315 = vmatpush.bf16.msra.mxu0 %v231
    %316 = vmatpush.bf16.msra.mxu0 %v229
    %317 = vmatpush.bf16.msra.mxu0 %v227
    %318 = vmatpush.bf16.msra.mxu0 %v225
    %319 = vmatpush.bf16.msra.mxu0 %v223
    %320 = vmatmul.bf16.gmra.mxu0 %v107
    %v321 = vpop.f32.mrf.mxu0
    %v322 = vadd.f32 %v308, %v321
    %v323 = vpop.f32.mrf.mxu0
    %v324 = vadd.f32 %v310, %v323
    %325 = vdwg.mxu0
    %v326 = vmax.f32 %v294, 0.0
    %v327 = vmax.f32 %v322, 0.0
    %v328 = vmax.f32 %v296, 0.0
    %v329 = vmax.f32 %v324, 0.0
    %v330 = vpack.c.bf16 %v328, %v326
    %v331 = vpack.c.bf16 %v329, %v327
    %v332 = vld [vmem:[#allocation7] sm:$0xff]
    %v333 = vld [vmem:[#allocation7 + $0x8] sm:$0xff]
    %v334 = vld [vmem:[#allocation7 + $0x10] sm:$0xff]
    %v335 = vld [vmem:[#allocation7 + $0x18] sm:$0xff]
    %v336 = vld [vmem:[#allocation7 + $0x20] sm:$0xff]
    %v337 = vld [vmem:[#allocation7 + $0x28] sm:$0xff]
    %v338 = vld [vmem:[#allocation7 + $0x30] sm:$0xff]
    %v339 = vld [vmem:[#allocation7 + $0x38] sm:$0xff]
    %v340 = vld [vmem:[#allocation7 + $0x40] sm:$0xff]
    %v341 = vld [vmem:[#allocation7 + $0x48] sm:$0xff]
    %v342 = vld [vmem:[#allocation7 + $0x50] sm:$0xff]
    %v343 = vld [vmem:[#allocation7 + $0x58] sm:$0xff]
    %v344 = vld [vmem:[#allocation7 + $0x60] sm:$0xff]
    %v345 = vld [vmem:[#allocation7 + $0x68] sm:$0xff]
    %v346 = vld [vmem:[#allocation7 + $0x70] sm:$0xff]
    %v347 = vld [vmem:[#allocation7 + $0x78] sm:$0xff]
    %v348 = vld [vmem:[#allocation7 + $0x80] sm:$0xff]
    %v349 = vld [vmem:[#allocation7 + $0x88] sm:$0xff]
    %v350 = vld [vmem:[#allocation7 + $0x90] sm:$0xff]
    %v351 = vld [vmem:[#allocation7 + $0x98] sm:$0xff]
    %v352 = vld [vmem:[#allocation7 + $0xa0] sm:$0xff]
    %v353 = vld [vmem:[#allocation7 + $0xa8] sm:$0xff]
    %v354 = vld [vmem:[#allocation7 + $0xb0] sm:$0xff]
    %v355 = vld [vmem:[#allocation7 + $0xb8] sm:$0xff]
    %v356 = vld [vmem:[#allocation7 + $0xc0] sm:$0xff]
    %v357 = vld [vmem:[#allocation7 + $0xc8] sm:$0xff]
    %v358 = vld [vmem:[#allocation7 + $0xd0] sm:$0xff]
    %v359 = vld [vmem:[#allocation7 + $0xd8] sm:$0xff]
    %v360 = vld [vmem:[#allocation7 + $0xe0] sm:$0xff]
    %v361 = vld [vmem:[#allocation7 + $0xe8] sm:$0xff]
    %v362 = vld [vmem:[#allocation7 + $0xf0] sm:$0xff]
    %v363 = vld [vmem:[#allocation7 + $0xf8] sm:$0xff]
    %v396 = vunpack.c.l.b16 %v332
    %v397 = vunpack.c.h.b16 %v332
    %v398 = vunpack.c.l.b16 %v333
    %v399 = vunpack.c.h.b16 %v333
    %v400 = vunpack.c.l.b16 %v334
    %v401 = vunpack.c.h.b16 %v334
    %v402 = vunpack.c.l.b16 %v335
    %v403 = vunpack.c.h.b16 %v335
    %v404 = vunpack.c.l.b16 %v336
    %v405 = vunpack.c.h.b16 %v336
    %v406 = vunpack.c.l.b16 %v337
    %v407 = vunpack.c.h.b16 %v337
    %v408 = vunpack.c.l.b16 %v338
    %v409 = vunpack.c.h.b16 %v338
    %v410 = vunpack.c.l.b16 %v339
    %v411 = vunpack.c.h.b16 %v339
    %v412 = vunpack.c.l.b16 %v340
    %v413 = vunpack.c.h.b16 %v340
    %v414 = vunpack.c.l.b16 %v341
    %v415 = vunpack.c.h.b16 %v341
    %v416 = vunpack.c.l.b16 %v342
    %v417 = vunpack.c.h.b16 %v342
    %v418 = vunpack.c.l.b16 %v343
    %v419 = vunpack.c.h.b16 %v343
    %v420 = vunpack.c.l.b16 %v344
    %v421 = vunpack.c.h.b16 %v344
    %v422 = vunpack.c.l.b16 %v345
    %v423 = vunpack.c.h.b16 %v345
    %v424 = vunpack.c.l.b16 %v346
    %v425 = vunpack.c.h.b16 %v346
    %v426 = vunpack.c.l.b16 %v347
    %v427 = vunpack.c.h.b16 %v347
    %v428 = vunpack.c.l.b16 %v348
    %v429 = vunpack.c.h.b16 %v348
    %v430 = vunpack.c.l.b16 %v349
    %v431 = vunpack.c.h.b16 %v349
    %v432 = vunpack.c.l.b16 %v350
    %v433 = vunpack.c.h.b16 %v350
    %v434 = vunpack.c.l.b16 %v351
    %v435 = vunpack.c.h.b16 %v351
    %v436 = vunpack.c.l.b16 %v352
    %v437 = vunpack.c.h.b16 %v352
    %v438 = vunpack.c.l.b16 %v353
    %v439 = vunpack.c.h.b16 %v353
    %v440 = vunpack.c.l.b16 %v354
    %v441 = vunpack.c.h.b16 %v354
    %v442 = vunpack.c.l.b16 %v355
    %v443 = vunpack.c.h.b16 %v355
    %v444 = vunpack.c.l.b16 %v356
    %v445 = vunpack.c.h.b16 %v356
    %v446 = vunpack.c.l.b16 %v357
    %v447 = vunpack.c.h.b16 %v357
    %v448 = vunpack.c.l.b16 %v358
    %v449 = vunpack.c.h.b16 %v358
    %v450 = vunpack.c.l.b16 %v359
    %v451 = vunpack.c.h.b16 %v359
    %v452 = vunpack.c.l.b16 %v360
    %v453 = vunpack.c.h.b16 %v360
    %v454 = vunpack.c.l.b16 %v361
    %v455 = vunpack.c.h.b16 %v361
    %v456 = vunpack.c.l.b16 %v362
    %v457 = vunpack.c.h.b16 %v362
    %v458 = vunpack.c.l.b16 %v363
    %v459 = vunpack.c.h.b16 %v363
    %v460 = vpack.c.b16 %v398, %v396
    %v461 = vpack.c.b16 %v399, %v397
    %v462 = vpack.c.b16 %v402, %v400
    %v463 = vpack.c.b16 %v403, %v401
    %v464 = vpack.c.b16 %v406, %v404
    %v465 = vpack.c.b16 %v407, %v405
    %v466 = vpack.c.b16 %v410, %v408
    %v467 = vpack.c.b16 %v411, %v409
    %v468 = vpack.c.b16 %v414, %v412
    %v469 = vpack.c.b16 %v415, %v413
    %v470 = vpack.c.b16 %v418, %v416
    %v471 = vpack.c.b16 %v419, %v417
    %v472 = vpack.c.b16 %v422, %v420
    %v473 = vpack.c.b16 %v423, %v421
    %v474 = vpack.c.b16 %v426, %v424
    %v475 = vpack.c.b16 %v427, %v425
    %v476 = vpack.c.b16 %v430, %v428
    %v477 = vpack.c.b16 %v431, %v429
    %v478 = vpack.c.b16 %v434, %v432
    %v479 = vpack.c.b16 %v435, %v433
    %v480 = vpack.c.b16 %v438, %v436
    %v481 = vpack.c.b16 %v439, %v437
    %v482 = vpack.c.b16 %v442, %v440
    %v483 = vpack.c.b16 %v443, %v441
    %v484 = vpack.c.b16 %v446, %v444
    %v485 = vpack.c.b16 %v447, %v445
    %v486 = vpack.c.b16 %v450, %v448
    %v487 = vpack.c.b16 %v451, %v449
    %v488 = vpack.c.b16 %v454, %v452
    %v489 = vpack.c.b16 %v455, %v453
    %v490 = vpack.c.b16 %v458, %v456
    %v491 = vpack.c.b16 %v459, %v457
    %524 = vmatpush.bf16.msra.mxu0 %v474
    %525 = vmatpush.bf16.msra.mxu0 %v472
    %526 = vmatpush.bf16.msra.mxu0 %v470
    %527 = vmatpush.bf16.msra.mxu0 %v468
    %528 = vmatpush.bf16.msra.mxu0 %v466
    %529 = vmatpush.bf16.msra.mxu0 %v464
    %530 = vmatpush.bf16.msra.mxu0 %v462
    %531 = vmatpush.bf16.msra.mxu0 %v460
    %532 = vmatmul.bf16.gmra.mxu0 %v330
    %v533 = vpop.f32.mrf.mxu0
    %v534 = vadd.f32 %v64, %v533
    %v535 = vpop.f32.mrf.mxu0
    %v536 = vadd.f32 %v66, %v535
    %537 = vdwg.mxu0
    %538 = vmatpush.bf16.msra.mxu0 %v490
    %539 = vmatpush.bf16.msra.mxu0 %v488
    %540 = vmatpush.bf16.msra.mxu0 %v486
    %541 = vmatpush.bf16.msra.mxu0 %v484
    %542 = vmatpush.bf16.msra.mxu0 %v482
    %543 = vmatpush.bf16.msra.mxu0 %v480
    %544 = vmatpush.bf16.msra.mxu0 %v478
    %545 = vmatpush.bf16.msra.mxu0 %v476
    %546 = vmatmul.bf16.gmra.mxu0 %v331
    %v547 = vpop.f32.mrf.mxu0
    %v548 = vadd.f32 %v534, %v547
    %v549 = vpop.f32.mrf.mxu0
    %v550 = vadd.f32 %v536, %v549
    %551 = vdwg.mxu0
    %552 = vmatpush.bf16.msra.mxu0 %v475
    %553 = vmatpush.bf16.msra.mxu0 %v473
    %554 = vmatpush.bf16.msra.mxu0 %v471
    %555 = vmatpush.bf16.msra.mxu0 %v469
    %556 = vmatpush.bf16.msra.mxu0 %v467
    %557 = vmatpush.bf16.msra.mxu0 %v465
    %558 = vmatpush.bf16.msra.mxu0 %v463
    %559 = vmatpush.bf16.msra.mxu0 %v461
    %560 = vmatmul.bf16.gmra.mxu0 %v330
    %v561 = vpop.f32.mrf.mxu0
    %v562 = vadd.f32 %v65, %v561
    %v563 = vpop.f32.mrf.mxu0
    %v564 = vadd.f32 %v67, %v563
    %565 = vdwg.mxu0
    %566 = vmatpush.bf16.msra.mxu0 %v491
    %567 = vmatpush.bf16.msra.mxu0 %v489
    %568 = vmatpush.bf16.msra.mxu0 %v487
    %569 = vmatpush.bf16.msra.mxu0 %v485
    %570 = vmatpush.bf16.msra.mxu0 %v483
    %571 = vmatpush.bf16.msra.mxu0 %v481
    %572 = vmatpush.bf16.msra.mxu0 %v479
    %573 = vmatpush.bf16.msra.mxu0 %v477
    %574 = vmatmul.bf16.gmra.mxu0 %v331
    %v575 = vpop.f32.mrf.mxu0
    %v576 = vadd.f32 %v562, %v575
    %v577 = vpop.f32.mrf.mxu0
    %v578 = vadd.f32 %v564, %v577
    %579 = vdwg.mxu0
    %v580 = vadd.f32 %v548, %v576
    %581 = vadd.xlane.f32.xlu0 %v580
    %v582 = vpop.xlane.xlu0 %581
    %v583 = vadd.f32 %v550, %v578
    %584 = vadd.xlane.f32.xlu0 %v583
    %v585 = vpop.xlane.xlu0 %584
    %v586 = vrcp.pop 256.0
    %v587 = vmul.f32 256.0, %v586
    %v588 = vsub.f32 1.0, %v587
    %v589 = vmul.f32 %v586, %v588
    %v590 = vadd.f32 %v586, %v589
    %vm591 = vweird.f32 %v586
    %v592 = vsel %vm591, %v586, %v590
    %v593 = vmul.f32 %v582, %v592
    %v594 = vmul.f32 %v585, %v592
    %v595 = vsub.f32 %v548, %v593
    %v596 = vsub.f32 %v576, %v593
    %v597 = vsub.f32 %v550, %v594
    %v598 = vsub.f32 %v578, %v594
    %v599 = vmul.f32 %v595, %v595
    %v600 = vmul.f32 %v596, %v596
    %v601 = vmul.f32 %v597, %v597
    %v602 = vmul.f32 %v598, %v598
    %v603 = vadd.f32 %v599, %v600
    %604 = vadd.xlane.f32.xlu0 %v603
    %v605 = vpop.xlane.xlu0 %604
    %v606 = vadd.f32 %v601, %v602
    %607 = vadd.xlane.f32.xlu0 %v606
    %v608 = vpop.xlane.xlu0 %607
    %v609 = vmul.f32 %v605, %v592
    %v610 = vmul.f32 %v608, %v592
    %v611 = vadd.f32 %v609, 1e-05
    %v612 = vadd.f32 %v610, 1e-05
    %v613 = vrsqrt.pop %v611
    %v614 = vmul.f32 %v613, %v611
    %v615 = vmul.f32 %v614, %v613
    %v616 = vmul.f32 0.5, %v615
    %v617 = vsub.f32 1.5, %v616
    %v618 = vmul.f32 %v613, %v617
    %vm619 = vweird.f32 %v611
    %vm620 = vweird.f32 %v613
    %vm621 = vmor %vm619, %vm620
    %v622 = vsel %vm621, %v613, %v618
    %v623 = vrsqrt.pop %v612
    %v624 = vmul.f32 %v623, %v612
    %v625 = vmul.f32 %v624, %v623
    %v626 = vmul.f32 0.5, %v625
    %v627 = vsub.f32 1.5, %v626
    %v628 = vmul.f32 %v623, %v627
    %vm629 = vweird.f32 %v612
    %vm630 = vweird.f32 %v623
    %vm631 = vmor %vm629, %vm630
    %v632 = vsel %vm631, %v623, %v628
    %v633 = vmul.f32 %v595, %v622
    %v634 = vmul.f32 %v596, %v622
    %v635 = vmul.f32 %v597, %v632
    %v636 = vmul.f32 %v598, %v632
    %637 = vst [vmem:[#allocation8] sm:$0xff] %v633
    %638 = vst [vmem:[#allocation8 + $0x8] sm:$0xff] %v634
    %639 = vst [vmem:[#allocation8 + $0x10] sm:$0xff] %v635
    %640 = vst [vmem:[#allocation8 + $0x18] sm:$0xff] %v636
    // Predicated region
    $region26: #{tpu_custom_call.1} parent=1 // pred_check
      _
    $region27: #{tpu_custom_call.1} parent=1 // pred_check_branch
      %642 = sbr.rel (0) target = $region29
    $region28: #{tpu_custom_call.1} parent=1 // pred_region
      %644 = vsyncadd [#allocation4], 0
      %s645 = sshll.u32 [#allocation8], 4
      %s646 = int_to_ptr.vmem [resolvable:$true] %s645
      %s647 = sshll.u32 %s3, 4
      %s648 = int_to_ptr.hbm [resolvable:$true] %s647
      %653 = dma.vmem_to_hbm [thread:$0]  %s646, 512, %s648, [#allocation4], 256, 256, 16
    $region29: #{tpu_custom_call.1} parent=1 // pred_fallthru
      _
    // Predicated region
    $region30: #{tpu_custom_call.1} parent=1 // pred_check
      _
    $region31: #{tpu_custom_call.1} parent=1 // pred_check_branch
      %655 = sbr.rel (0) target = $region33
    $region32: #{tpu_custom_call.1} parent=1 // pred_region
      %657 = dma.done [#allocation4], 512
    $region33: #{tpu_custom_call.1} parent=1 // pred_fallthru
      _
    %658 = vsyncpa [#allocation3], 1
    %659 = vsyncpa [#allocation6], 1
    %660 = vsyncpa [#allocation4], 1

</llo_original>
